<compile_context>
chip_gen: v7x
topology: tpu7x:2x2x1
jax: 0.10.0
libtpu: 0.0.40
codegen_flags: <defaults>
</compile_context>

<pallas_src>
import jax
import jax.numpy as jnp
from jax.experimental import pallas as pl
from jax.experimental.pallas import tpu as pltpu


# ---------------------------------------------------------------------------
# Kernel: one full-width MXU matmul per grid step on lane-dense packed tiles.
# ---------------------------------------------------------------------------
def _block_linear_kernel(x_ref, w_ref, b_ref, o_ref):
    # x_ref: (1, TN, G*Din)          lane-dense packed activations (one group)
    # w_ref: (1, G*Din, G*Dout)      block-diagonal packed weights (one group)
    # b_ref: (num_groups, 1, G*Dout) ALL packed biases (resident, single DMA)
    # o_ref: (1, TN, G*Dout)         lane-dense packed output tile
    acc = jnp.dot(x_ref[0], w_ref[0], preferred_element_type=jnp.float32)
    acc = acc + b_ref[pl.program_id(0)].astype(jnp.float32)  # (1, G*Dout) bcast
    o_ref[0] = acc.astype(o_ref.dtype)


# ---------------------------------------------------------------------------
# Heuristic helpers.
# ---------------------------------------------------------------------------
def _largest_divisor_leq(n, cap):
    cap = max(1, min(n, cap))
    for d in range(cap, 0, -1):
        if n % d == 0:
            return d
    return 1


def _choose_row_tile(n, cap):
    """Largest row tile <= cap dividing n that satisfies the (8,128) rule
    (multiple of 8), falling back to the full extent (always legal)."""
    if n <= cap:
        return n
    for d in range(min(n, cap), 7, -1):
        if n % d == 0 and d % 8 == 0:
            return d
    return n


def _ceil_to(v, m):
    return -(-v // m) * m


def _footprint_bytes(group, row_tile, din, dout, num_groups, itemsize):
    """Approximate per-step VMEM footprint (double-buffered x/w/out tiles +
    resident bias), accounting for (8,128) layout padding."""
    gdin_l = _ceil_to(group * din, 128)
    gdout_l = _ceil_to(group * dout, 128)
    tn = _ceil_to(row_tile, 8)
    x_b = tn * gdin_l * itemsize
    w_b = _ceil_to(group * din, 8) * gdout_l * itemsize
    o_b = tn * gdout_l * itemsize
    bias_b = num_groups * 8 * gdout_l * itemsize
    return 2 * (x_b + w_b + o_b) + bias_b


# ---------------------------------------------------------------------------
# Wrapper.
# ---------------------------------------------------------------------------
def block_linear(x, weight, bias=None, *, group_size=None, row_tile=None,
                 compute_dtype=None):
    """BlockLinear forward: out[b] = x[b] @ weight[b] + bias[b].

    x: (B, N, Din), weight: (B, Din, Dout), bias: (B, 1, Dout) or None.
    compute_dtype: optional (e.g. jnp.bfloat16) opt-in low-precision matmul.
    """
    B, N, Din = x.shape
    Bw, Din_w, Dout = weight.shape
    assert Bw == B and Din_w == Din
    out_dtype = x.dtype
    if bias is None:
        bias = jnp.zeros((B, 1, Dout), dtype=out_dtype)
    if compute_dtype is not None:
        x = x.astype(compute_dtype)
        weight = weight.astype(compute_dtype)
    itemsize = jnp.dtype(x.dtype).itemsize

    # ---- fused-group size G (lane-dense packing of small Din/Dout blocks) --
    if group_size is None:
        if Dout % 128 == 0:
            # Output lanes already dense: packing would only add an extra HBM
            # round-trip for the unpack transpose.  Skip it.
            G = 1
        else:
            cap = max(1, 256 // max(Din, Dout, 1))
            divs = [g for g in range(1, min(B, cap) + 1) if B % g == 0]
            G = max(divs, key=lambda g: ((g * Dout) % 128 == 0,
                                         (g * Din) % 128 == 0, g))
    else:
        G = group_size
    assert B % G == 0
    num_groups = B // G

    # ---- row tile (big tiles amortize the ~0.35 us per-step overhead) ------
    TN = _choose_row_tile(N, 1024) if row_tile is None else row_tile
    assert N % TN == 0

    # ---- keep both v7x TensorCores busy: need >= 2 grid steps --------------
    if num_groups * (N // TN) < 2:
        if G > 1 and B >= 2:
            G = _largest_divisor_leq(B, B // 2)
            num_groups = B // G
        elif N // TN == 1 and N % 16 == 0:
            TN = N // 2

    # ---- VMEM-aware shrink (v5e 16 MiB scoped default, v7x 64 MiB phys) ----
    vmem_limit = 32 * 1024 * 1024
    budget = 20 * 1024 * 1024
    while _footprint_bytes(G, TN, Din, Dout, num_groups, itemsize) > budget:
        new_tn = _choose_row_tile(N, TN // 2) if TN > 8 else TN
        if new_tn < TN:
            TN = new_tn
        elif G > 1:
            G = _largest_divisor_leq(B, max(1, G // 2))
            num_groups = B // G
        else:
            break
    num_row_tiles = N // TN
    gdin, gdout = G * Din, G * Dout

    # ---- pack to lane-dense layouts (no-op when G == 1) ---------------------
    if G == 1:
        x_p, w_p = x, weight
    else:
        x_p = (x.reshape(num_groups, G, N, Din)
                .transpose(0, 2, 1, 3)
                .reshape(num_groups, N, gdin))
        w4 = weight.reshape(num_groups, G, Din, Dout)
        eye = jnp.eye(G, dtype=weight.dtype)
        w_p = (w4[:, :, None, :, :] * eye[None, :, :, None, None])
        w_p = w_p.transpose(0, 1, 3, 2, 4).reshape(num_groups, gdin, gdout)
    b_p = bias.reshape(num_groups, 1, gdout)

    cost = pl.CostEstimate(
        flops=2 * B * N * Din * Dout,
        transcendentals=0,
        bytes_accessed=(x_p.size + w_p.size + b_p.size
                        + num_groups * N * gdout) * itemsize,
    )

    out_packed = pl.pallas_call(
        _block_linear_kernel,
        out_shape=jax.ShapeDtypeStruct((num_groups, N, gdout), out_dtype),
        grid_spec=pltpu.PrefetchScalarGridSpec(
            num_scalar_prefetch=0,
            # Row-tile axis innermost: the weight tile (index_map independent
            # of j) stays resident across consecutive row tiles of one group.
            grid=(num_groups, num_row_tiles),
            in_specs=[
                pl.BlockSpec((1, TN, gdin), lambda i, j: (i, j, 0)),
                pl.BlockSpec((1, gdin, gdout), lambda i, j: (i, 0, 0)),
                # Entire bias stays resident in VMEM (one DMA for the call).
                pl.BlockSpec((num_groups, 1, gdout), lambda i, j: (0, 0, 0)),
            ],
            out_specs=pl.BlockSpec((1, TN, gdout), lambda i, j: (i, j, 0)),
        ),
        compiler_params=pltpu.CompilerParams(
            dimension_semantics=("parallel", "parallel"),
            vmem_limit_bytes=vmem_limit,
        ),
        cost_estimate=cost,
    )(x_p, w_p, b_p)

    if G == 1:
        return out_packed
    # Un-pack the lane-dense slab back to the PyTorch layout (B, N, Dout).
    return (out_packed
            .reshape(num_groups, N, G, Dout)
            .transpose(0, 2, 1, 3)
            .reshape(B, N, Dout))


if __name__ == "__main__":
    # Small shapes consistent with the module: 16 independent 32->32 blocks,
    # 128 rows per block.  Heuristic picks G=8 -> one (128,256)x(256,256)
    # block-diagonal matmul per step, grid=(2, 1).
    num_blocks = 16
    input_block_dim = 32
    output_block_dim = 32
    rows_per_block = 128

    key = jax.random.PRNGKey(0)
    kx, kw, kb = jax.random.split(key, 3)

    # kaiming_uniform_(a=sqrt(5))-like bounds (torch fan_in for a 3-D weight
    # (B, Din, Dout) is Din * Dout).
    fan_in = input_block_dim * output_block_dim
    w_bound = float(jnp.sqrt(6.0 / ((1.0 + 5.0) * fan_in)))
    weight = jax.random.uniform(
        kw, (num_blocks, input_block_dim, output_block_dim),
        minval=-w_bound, maxval=w_bound, dtype=jnp.float32)
    b_bound = 1.0 / float(jnp.sqrt(fan_in))
    bias = jax.random.uniform(
        kb, (num_blocks, 1, output_block_dim),
        minval=-b_bound, maxval=b_bound, dtype=jnp.float32)
    x = jax.random.normal(
        kx, (num_blocks, rows_per_block, input_block_dim), dtype=jnp.float32)

    out = jax.jit(block_linear)(x, weight, bias)
    out = jax.block_until_ready(out)

    # Reference (same semantics as torch.bmm + bias broadcast).
    ref = jnp.einsum("bnk,bkm->bnm", x, weight) + bias
    assert out.shape == (num_blocks, rows_per_block, output_block_dim)
    assert jnp.allclose(out, ref, atol=1e-5, rtol=1e-5), float(
        jnp.max(jnp.abs(out - ref)))

    print("KERNEL_OK")
</pallas_src>

<mosaic_0001>
module attributes {stable_mosaic.version = 11 : i64} {
  func.func @_block_linear_kernel(%arg0: i32, %arg1: i32, %arg2: memref<1x128x256xf32, #tpu.memory_space<vmem>>, %arg3: memref<1x256x256xf32, #tpu.memory_space<vmem>>, %arg4: memref<2x1x256xf32, #tpu.memory_space<vmem>>, %arg5: memref<1x128x256xf32, #tpu.memory_space<vmem>>) attributes {dimension_semantics = [#tpu.dimension_semantics<parallel>, #tpu.dimension_semantics<parallel>], iteration_bounds = array<i64: 2, 1>, scalar_prefetch = 0 : i64, scratch_operands = 0 : i64, tpu.core_type = #tpu.core_type<tc>, window_params = [{transform_indices = @transform_0, window_bounds = array<i64: 1, 128, 256>}, {transform_indices = @transform_1, window_bounds = array<i64: 1, 256, 256>}, {pipeline_mode = #tpu.pipeline_mode<synchronous>, transform_indices = @transform_2, window_bounds = array<i64: 2, 1, 256>}, {transform_indices = @transform_3, window_bounds = array<i64: 1, 128, 256>}]} {
    %c0 = arith.constant 0 : index
    %c0_0 = arith.constant 0 : index
    %c0_1 = arith.constant 0 : index
    %0 = vector.load %arg2[%c0, %c0_0, %c0_1] : memref<1x128x256xf32, #tpu.memory_space<vmem>>, vector<1x128x256xf32>
    %1 = vector.shape_cast %0 : vector<1x128x256xf32> to vector<128x256xf32>
    %c0_2 = arith.constant 0 : index
    %c0_3 = arith.constant 0 : index
    %c0_4 = arith.constant 0 : index
    %2 = vector.load %arg3[%c0_2, %c0_3, %c0_4] : memref<1x256x256xf32, #tpu.memory_space<vmem>>, vector<1x256x256xf32>
    %3 = vector.shape_cast %2 : vector<1x256x256xf32> to vector<256x256xf32>
    %cst = arith.constant dense<0.000000e+00> : vector<128x256xf32>
    %4 = tpu.matmul %1, %3, %cst {dimension_numbers = #tpu.dot_dimension_numbers<[1], [0], [0], [1], [0, 0, 1, 1], [], []>} : vector<128x256xf32>, vector<256x256xf32>, vector<128x256xf32> -> vector<128x256xf32>
    %5 = arith.index_cast %arg0 : i32 to index
    %c0_5 = arith.constant 0 : index
    %c0_6 = arith.constant 0 : index
    %6 = vector.load %arg4[%5, %c0_5, %c0_6] : memref<2x1x256xf32, #tpu.memory_space<vmem>>, vector<1x1x256xf32>
    %7 = vector.shape_cast %6 : vector<1x1x256xf32> to vector<1x256xf32>
    %8 = vector.broadcast %7 : vector<1x256xf32> to vector<128x256xf32>
    %9 = arith.addf %4, %8 : vector<128x256xf32>
    %c0_7 = arith.constant 0 : index
    %c0_8 = arith.constant 0 : index
    %c0_9 = arith.constant 0 : index
    %10 = vector.load %arg5[%c0_7, %c0_8, %c0_9] : memref<1x128x256xf32, #tpu.memory_space<vmem>>, vector<1x128x256xf32>
    %11 = vector.shape_cast %10 : vector<1x128x256xf32> to vector<128x256xf32>
    %12 = vector.shape_cast %9 : vector<128x256xf32> to vector<1x128x256xf32>
    tpu.vector_store %arg5[%c0_7, %c0_8, %c0_9], %12 {strides = array<i32>} : memref<1x128x256xf32, #tpu.memory_space<vmem>>, vector<1x128x256xf32>,
    return
  }
  func.func @transform_0(%arg0: i32, %arg1: i32) -> (i32, i32, i32) {
    %c0_i32 = arith.constant 0 : i32
    %c0_i32_0 = arith.constant 0 : i32
    return %arg0, %arg1, %c0_i32 : i32, i32, i32
  }
  func.func @transform_1(%arg0: i32, %arg1: i32) -> (i32, i32, i32) {
    %c0_i32 = arith.constant 0 : i32
    %c0_i32_0 = arith.constant 0 : i32
    %c0_i32_1 = arith.constant 0 : i32
    return %arg0, %c0_i32, %c0_i32_0 : i32, i32, i32
  }
  func.func @transform_2(%arg0: i32, %arg1: i32) -> (i32, i32, i32) {
    %c0_i32 = arith.constant 0 : i32
    %c0_i32_0 = arith.constant 0 : i32
    %c0_i32_1 = arith.constant 0 : i32
    %c0_i32_2 = arith.constant 0 : i32
    return %c0_i32, %c0_i32_0, %c0_i32_1 : i32, i32, i32
  }
  func.func @transform_3(%arg0: i32, %arg1: i32) -> (i32, i32, i32) {
    %c0_i32 = arith.constant 0 : i32
    %c0_i32_0 = arith.constant 0 : i32
    return %arg0, %arg1, %c0_i32 : i32, i32, i32
  }
}

</mosaic_0001>

<llo_original>
// kernel: block_linear.1
$region0: #{block_linear.1}
  #allocation0 [shape = 'u32[]', space=smem, size = 0x4, offset = 0x4, fixed_abs, tag = 'smem constant byte address 0x4 - core index']
  #allocation1 [shape = 'u32[144,128]{1,0:T(1,128)}', space=vmem, size = 0x12000, scoped, tag = 'internal scratch']
  %s0 = inlined_call_operand.vmem [shape: f32[2,128,256], index: 0, kind: input, shape index: {}]
  %s1 = inlined_call_operand.vmem [shape: f32[2,256,256], index: 1, kind: input, shape index: {}]
  %s2 = inlined_call_operand.vmem [shape: f32[2,1,256], index: 2, kind: input, shape index: {}]
  %s3 = inlined_call_operand.vmem [shape: f32[2,128,256], index: 3, kind: output, shape index: {}]
  %s4 = sld [smem:[#allocation0]]
  $region45: #{block_linear.1} parent=0
    _
  %s6 = ssub.s32 1, %s4
  %s7 = scalar_select 0, %s6, %s4
  loop: start=0, step=1, limit=4
  $region2: #{block_linear.1} parent=0 // loop_pre_header
    _
  $region3: #{block_linear.1} parent=0 // loop_header
    %s9 = sphi 0, %s13
    %p10 = scmp.ge.s32.totalorder %s9, 4
    %s16 = sphi 0, %s28
    %s17 = sphi 0, %s24
    %s18 = sphi 0, %s16
    %s19 = sphi 0, %s17
    %s20 = sphi 0, %s18
    %s21 = sphi 0, %s19
    %s33 = sphi 0, %s35
    %s36 = sphi 0, %s33
    %s37 = sphi 0, %s36
    %s53 = sphi 0, %s37
    %s59 = sphi 0, %s61
    %s62 = sphi 0, %s59
    %s63 = sphi 0, %s62
    %s79 = sphi 0, %s63
    %s83 = sphi 0, %s83
    %s85 = sphi 0, %s83
    %s86 = sphi 0, %s85
    %s100 = sphi 0, %s86
    %s108 = sphi 0, %s110
    %s111 = sphi 0, %s108
    %s112 = sphi 0, %s111
    %s128 = sphi 0, %s112
  $region4: #{block_linear.1} parent=0 // loop_header_branch
    %12 = sbr.rel (%p10) target = $region8
  $region5: #{block_linear.1} parent=0 // loop_body
    %s14 = ssub.s32 %s9, 1
    %s15 = ssub.s32 %s9, 2
    %s22 = sadd.s32 1, %s17
    %p23 = scmp.ge.s32.totalorder %s22, 1
    %s24 = scalar_select %p23, 0, %s22
    %s25 = sadd.s32 1, %s16
    %s26 = scalar_select %p23, %s25, %s16
    %p27 = scmp.ge.s32.totalorder %s26, 2
    %s28 = scalar_select %p27, 0, %s26
    %s29 = ssub.s32 %s16, %s28
    %s30 = ssub.s32 %s17, %s24
    %s31 = sor.u32 %s29, %s30
    %p32 = scmp.eq.s32.totalorder %s31, 0
    %s34 = sadd.s32 %s33, 1
    %s35 = scalar_select %p32, %s33, %s34
    %p38 = pneg %p32
    %p39 = scmp.eq.s32.totalorder %s9, 1
    %p40 = por %p38, %p39
    %p41 = scmp.ne.s32.totalorder %s33, %s36
    %p42 = scmp.eq.s32.totalorder %s9, 0
    %p43 = por %p41, %p42
    %p44 = scmp.ne.s32.totalorder %s33, %s36
    %p45 = scmp.eq.s32.totalorder %s14, 1
    %p46 = por %p44, %p45
    %p47 = scmp.ne.s32.totalorder %s36, %s37
    %p48 = scmp.eq.s32.totalorder %s14, 0
    %p49 = por %p47, %p48
    %p50 = scmp.ne.s32.totalorder %s36, %s37
    %p51 = scmp.eq.s32.totalorder %s15, 1
    %p52 = por %p50, %p51
    %p54 = scmp.ne.s32.totalorder %s37, %s53
    %p55 = scmp.eq.s32.totalorder %s15, 0
    %p56 = por %p54, %p55
    %s57 = ssub.s32 %s16, %s28
    %p58 = scmp.eq.s32.totalorder %s57, 0
    %s60 = sadd.s32 %s59, 1
    %s61 = scalar_select %p58, %s59, %s60
    %p64 = pneg %p58
    %p65 = scmp.eq.s32.totalorder %s9, 1
    %p66 = por %p64, %p65
    %p67 = scmp.ne.s32.totalorder %s59, %s62
    %p68 = scmp.eq.s32.totalorder %s9, 0
    %p69 = por %p67, %p68
    %p70 = scmp.ne.s32.totalorder %s59, %s62
    %p71 = scmp.eq.s32.totalorder %s14, 1
    %p72 = por %p70, %p71
    %p73 = scmp.ne.s32.totalorder %s62, %s63
    %p74 = scmp.eq.s32.totalorder %s14, 0
    %p75 = por %p73, %p74
    %p76 = scmp.ne.s32.totalorder %s62, %s63
    %p77 = scmp.eq.s32.totalorder %s15, 1
    %p78 = por %p76, %p77
    %p80 = scmp.ne.s32.totalorder %s63, %s79
    %p81 = scmp.eq.s32.totalorder %s15, 0
    %p82 = por %p80, %p81
    %s84 = sadd.s32 %s83, 1
    %p87 = scmp.eq.s32.totalorder %s9, 1
    %p88 = scmp.ne.s32.totalorder %s83, %s85
    %p89 = scmp.eq.s32.totalorder %s9, 0
    %p90 = por %p88, %p89
    %p91 = scmp.ne.s32.totalorder %s83, %s85
    %p92 = scmp.eq.s32.totalorder %s14, 1
    %p93 = por %p91, %p92
    %p94 = scmp.ne.s32.totalorder %s85, %s86
    %p95 = scmp.eq.s32.totalorder %s14, 0
    %p96 = por %p94, %p95
    %p97 = scmp.ne.s32.totalorder %s85, %s86
    %p98 = scmp.eq.s32.totalorder %s15, 1
    %p99 = por %p97, %p98
    %p101 = scmp.ne.s32.totalorder %s86, %s100
    %p102 = scmp.eq.s32.totalorder %s15, 0
    %p103 = por %p101, %p102
    %s104 = ssub.s32 %s16, %s28
    %s105 = ssub.s32 %s17, %s24
    %s106 = sor.u32 %s104, %s105
    %p107 = scmp.eq.s32.totalorder %s106, 0
    %s109 = sadd.s32 %s108, 1
    %s110 = scalar_select %p107, %s108, %s109
    %p113 = pneg %p107
    %p114 = scmp.eq.s32.totalorder %s9, 1
    %p115 = por %p113, %p114
    %p116 = scmp.ne.s32.totalorder %s108, %s111
    %p117 = scmp.eq.s32.totalorder %s9, 0
    %p118 = por %p116, %p117
    %p119 = scmp.ne.s32.totalorder %s108, %s111
    %p120 = scmp.eq.s32.totalorder %s14, 1
    %p121 = por %p119, %p120
    %p122 = scmp.ne.s32.totalorder %s111, %s112
    %p123 = scmp.eq.s32.totalorder %s14, 0
    %p124 = por %p122, %p123
    %p125 = scmp.ne.s32.totalorder %s111, %s112
    %p126 = scmp.eq.s32.totalorder %s15, 1
    %p127 = por %p125, %p126
    %p129 = scmp.ne.s32.totalorder %s112, %s128
    %p130 = scmp.eq.s32.totalorder %s15, 0
    %p131 = por %p129, %p130
    %p132 = scmp.le.s32.totalorder 1, %s9
    %p133 = scmp.lt.s32.totalorder %s9, 3
    %p134 = pnand %p132, %p133
    %p135 = pneg %p134
    // Predicated region
    $region9: #{block_linear.1} parent=5 // pred_check
      _
    $region10: #{block_linear.1} parent=5 // pred_check_branch
      %137 = sbr.rel (%p134) target = $region12
    $region11: #{block_linear.1} parent=5 // pred_region
      %s138 = ssub.s32 %s9, 1
      // Predicated region
      $region13: #{block_linear.1} parent=11 // pred_check
        %p139 = pneg %p96
      $region14: #{block_linear.1} parent=11 // pred_check_branch
        %141 = sbr.rel (%p139) target = $region16
      $region15: #{block_linear.1} parent=11 // pred_region
        _
      $region16: #{block_linear.1} parent=11 // pred_fallthru
        _
    $region12: #{block_linear.1} parent=5 // pred_fallthru
      _
    %p142 = scmp.lt.s32.totalorder %s9, 2
    // Predicated region
    $region17: #{block_linear.1} parent=5 // pred_check
      %p143 = pneg %p142
    $region18: #{block_linear.1} parent=5 // pred_check_branch
      %145 = sbr.rel (%p143) target = $region20
    $region19: #{block_linear.1} parent=5 // pred_region
      // Predicated region
      $region21: #{block_linear.1} parent=19 // pred_check
        %p146 = pneg %p43
      $region22: #{block_linear.1} parent=19 // pred_check_branch
        %148 = sbr.rel (%p146) target = $region24
      $region23: #{block_linear.1} parent=19 // pred_region
        %s149 = smul.u32 16, %s17
        %p150 = scmp.lt.s32.totalorder %s16, 1
        %s151 = scalar_select %p150, %s16, 1
        %p152 = scmp.lt.s32.totalorder %s149, 15
        %s153 = scalar_select %p152, %s149, 15
        %s154 = smul.addr %s153, 2
        %s155 = smul.addr %s151, 32
        %s156 = sadd.s32 %s154, %s155
        %s157 = smul.addr %s156, 8
        %s158 = scalar_lea.vmem %s0, %s157
        %s159 = smul.u32 16, %s17
      $region24: #{block_linear.1} parent=19 // pred_fallthru
        _
      // Predicated region
      $region25: #{block_linear.1} parent=19 // pred_check
        %p160 = pneg %p69
      $region26: #{block_linear.1} parent=19 // pred_check_branch
        %162 = sbr.rel (%p160) target = $region28
      $region27: #{block_linear.1} parent=19 // pred_region
        %p163 = scmp.lt.s32.totalorder %s16, 1
        %s164 = scalar_select %p163, %s16, 1
        %s165 = smul.addr %s164, 64
        %s166 = smul.addr %s165, 8
        %s167 = scalar_lea.vmem %s1, %s166
      $region28: #{block_linear.1} parent=19 // pred_fallthru
        _
    $region20: #{block_linear.1} parent=5 // pred_fallthru
      _
    %p168 = scmp.le.s32.totalorder 1, %s9
    %p169 = scmp.lt.s32.totalorder %s9, 3
    %p170 = pnand %p168, %p169
    %p171 = pneg %p170
    // Predicated region
    $region29: #{block_linear.1} parent=5 // pred_check
      _
    $region30: #{block_linear.1} parent=5 // pred_check_branch
      %173 = sbr.rel (%p170) target = $region32
    $region31: #{block_linear.1} parent=5 // pred_region
      %s174 = ssub.s32 %s9, 1
      %s175 = smul.u32 16, %s19
      %p176 = scmp.lt.s32.totalorder %s18, 1
      %s177 = scalar_select %p176, %s18, 1
      %p178 = scmp.lt.s32.totalorder %s175, 15
      %s179 = scalar_select %p178, %s175, 15
      %s180 = smul.addr %s179, 2
      %s181 = smul.addr %s177, 32
      %s182 = sadd.s32 %s180, %s181
      %s183 = smul.addr %s182, 8
      %s184 = scalar_lea.vmem %s0, %s183
      %p185 = pneg %p49
      %p186 = pneg %p46
      %p187 = scmp.lt.s32.totalorder %s18, 1
      %s188 = scalar_select %p187, %s18, 1
      %s189 = smul.addr %s188, 64
      %s190 = smul.addr %s189, 8
      %s191 = scalar_lea.vmem %s1, %s190
      %p192 = pneg %p75
      %p193 = pneg %p72
      %p194 = pneg %p96
      %p195 = pneg %p93
      %p196 = pneg %p124
      %p197 = pneg %p121
      %s198 = smul.u32 16, %s19
      %p199 = scmp.lt.s32.totalorder %s18, 1
      %s200 = scalar_select %p199, %s18, 1
      %p201 = scmp.lt.s32.totalorder %s198, 15
      %s202 = scalar_select %p201, %s198, 15
      %s203 = smul.addr %s202, 2
      %s204 = smul.addr %s200, 32
      %s205 = sadd.s32 %s203, %s204
      %s206 = smul.addr %s205, 8
      %s207 = scalar_lea.vmem %s3, %s206
      %s208 = smul.u32 16, %s19
      %p209 = scmp.lt.s32.totalorder %s18, 1
      %s210 = scalar_select %p209, %s18, 1
      %p211 = scmp.lt.s32.totalorder %s208, 15
      %s212 = scalar_select %p211, %s208, 15
      %s213 = smul.addr %s212, 2
      %s214 = smul.addr %s210, 32
      %s215 = sadd.s32 %s213, %s214
      %s216 = smul.addr %s215, 8
      %s217 = scalar_lea.vmem %s0, %s216
      %s218 = smul.u32 16, %s19
      %p219 = scmp.lt.s32.totalorder %s18, 1
      %s220 = scalar_select %p219, %s18, 1
      %s221 = smul.addr %s220, 64
      %s222 = smul.addr %s221, 8
      %s223 = scalar_lea.vmem %s1, %s222
      %s224 = smul.u32 16, %s19
      %p225 = scmp.lt.s32.totalorder %s18, 1
      %s226 = scalar_select %p225, %s18, 1
      %p227 = scmp.lt.s32.totalorder %s224, 15
      %s228 = scalar_select %p227, %s224, 15
      %s229 = smul.addr %s228, 2
      %s230 = smul.addr %s226, 32
      %s231 = sadd.s32 %s229, %s230
      %s232 = smul.addr %s231, 8
      %s233 = scalar_lea.vmem %s3, %s232
      %s234 = smul.u32 16, %s19
      %v235 = vld [vmem:[%s217] sm:$0xff]
      %v236 = vld [vmem:[%s217 + $0x8] sm:$0xff]
      %v237 = vld [vmem:[%s217 + $0x10] sm:$0xff]
      %v238 = vld [vmem:[%s217 + $0x18] sm:$0xff]
      %v239 = vld [vmem:[%s217 + $0x20] sm:$0xff]
      %v240 = vld [vmem:[%s217 + $0x28] sm:$0xff]
      %v241 = vld [vmem:[%s217 + $0x30] sm:$0xff]
      %v242 = vld [vmem:[%s217 + $0x38] sm:$0xff]
      %v243 = vld [vmem:[%s217 + $0x40] sm:$0xff]
      %v244 = vld [vmem:[%s217 + $0x48] sm:$0xff]
      %v245 = vld [vmem:[%s217 + $0x50] sm:$0xff]
      %v246 = vld [vmem:[%s217 + $0x58] sm:$0xff]
      %v247 = vld [vmem:[%s217 + $0x60] sm:$0xff]
      %v248 = vld [vmem:[%s217 + $0x68] sm:$0xff]
      %v249 = vld [vmem:[%s217 + $0x70] sm:$0xff]
      %v250 = vld [vmem:[%s217 + $0x78] sm:$0xff]
      %v251 = vld [vmem:[%s217 + $0x80] sm:$0xff]
      %v252 = vld [vmem:[%s217 + $0x88] sm:$0xff]
      %v253 = vld [vmem:[%s217 + $0x90] sm:$0xff]
      %v254 = vld [vmem:[%s217 + $0x98] sm:$0xff]
      %v255 = vld [vmem:[%s217 + $0xa0] sm:$0xff]
      %v256 = vld [vmem:[%s217 + $0xa8] sm:$0xff]
      %v257 = vld [vmem:[%s217 + $0xb0] sm:$0xff]
      %v258 = vld [vmem:[%s217 + $0xb8] sm:$0xff]
      %v259 = vld [vmem:[%s217 + $0xc0] sm:$0xff]
      %v260 = vld [vmem:[%s217 + $0xc8] sm:$0xff]
      %v261 = vld [vmem:[%s217 + $0xd0] sm:$0xff]
      %v262 = vld [vmem:[%s217 + $0xd8] sm:$0xff]
      %v263 = vld [vmem:[%s217 + $0xe0] sm:$0xff]
      %v264 = vld [vmem:[%s217 + $0xe8] sm:$0xff]
      %v265 = vld [vmem:[%s217 + $0xf0] sm:$0xff]
      %v266 = vld [vmem:[%s217 + $0xf8] sm:$0xff]
      %v267 = vld [vmem:[%s223] sm:$0xff]
      %v268 = vld [vmem:[%s223 + $0x8] sm:$0xff]
      %v269 = vld [vmem:[%s223 + $0x10] sm:$0xff]
      %v270 = vld [vmem:[%s223 + $0x18] sm:$0xff]
      %v271 = vld [vmem:[%s223 + $0x20] sm:$0xff]
      %v272 = vld [vmem:[%s223 + $0x28] sm:$0xff]
      %v273 = vld [vmem:[%s223 + $0x30] sm:$0xff]
      %v274 = vld [vmem:[%s223 + $0x38] sm:$0xff]
      %v275 = vld [vmem:[%s223 + $0x40] sm:$0xff]
      %v276 = vld [vmem:[%s223 + $0x48] sm:$0xff]
      %v277 = vld [vmem:[%s223 + $0x50] sm:$0xff]
      %v278 = vld [vmem:[%s223 + $0x58] sm:$0xff]
      %v279 = vld [vmem:[%s223 + $0x60] sm:$0xff]
      %v280 = vld [vmem:[%s223 + $0x68] sm:$0xff]
      %v281 = vld [vmem:[%s223 + $0x70] sm:$0xff]
      %v282 = vld [vmem:[%s223 + $0x78] sm:$0xff]
      %v283 = vld [vmem:[%s223 + $0x80] sm:$0xff]
      %v284 = vld [vmem:[%s223 + $0x88] sm:$0xff]
      %v285 = vld [vmem:[%s223 + $0x90] sm:$0xff]
      %v286 = vld [vmem:[%s223 + $0x98] sm:$0xff]
      %v287 = vld [vmem:[%s223 + $0xa0] sm:$0xff]
      %v288 = vld [vmem:[%s223 + $0xa8] sm:$0xff]
      %v289 = vld [vmem:[%s223 + $0xb0] sm:$0xff]
      %v290 = vld [vmem:[%s223 + $0xb8] sm:$0xff]
      %v291 = vld [vmem:[%s223 + $0xc0] sm:$0xff]
      %v292 = vld [vmem:[%s223 + $0xc8] sm:$0xff]
      %v293 = vld [vmem:[%s223 + $0xd0] sm:$0xff]
      %v294 = vld [vmem:[%s223 + $0xd8] sm:$0xff]
      %v295 = vld [vmem:[%s223 + $0xe0] sm:$0xff]
      %v296 = vld [vmem:[%s223 + $0xe8] sm:$0xff]
      %v297 = vld [vmem:[%s223 + $0xf0] sm:$0xff]
      %v298 = vld [vmem:[%s223 + $0xf8] sm:$0xff]
      %v299 = vld [vmem:[%s223 + $0x100] sm:$0xff]
      %v300 = vld [vmem:[%s223 + $0x108] sm:$0xff]
      %v301 = vld [vmem:[%s223 + $0x110] sm:$0xff]
      %v302 = vld [vmem:[%s223 + $0x118] sm:$0xff]
      %v303 = vld [vmem:[%s223 + $0x120] sm:$0xff]
      %v304 = vld [vmem:[%s223 + $0x128] sm:$0xff]
      %v305 = vld [vmem:[%s223 + $0x130] sm:$0xff]
      %v306 = vld [vmem:[%s223 + $0x138] sm:$0xff]
      %v307 = vld [vmem:[%s223 + $0x140] sm:$0xff]
      %v308 = vld [vmem:[%s223 + $0x148] sm:$0xff]
      %v309 = vld [vmem:[%s223 + $0x150] sm:$0xff]
      %v310 = vld [vmem:[%s223 + $0x158] sm:$0xff]
      %v311 = vld [vmem:[%s223 + $0x160] sm:$0xff]
      %v312 = vld [vmem:[%s223 + $0x168] sm:$0xff]
      %v313 = vld [vmem:[%s223 + $0x170] sm:$0xff]
      %v314 = vld [vmem:[%s223 + $0x178] sm:$0xff]
      %v315 = vld [vmem:[%s223 + $0x180] sm:$0xff]
      %v316 = vld [vmem:[%s223 + $0x188] sm:$0xff]
      %v317 = vld [vmem:[%s223 + $0x190] sm:$0xff]
      %v318 = vld [vmem:[%s223 + $0x198] sm:$0xff]
      %v319 = vld [vmem:[%s223 + $0x1a0] sm:$0xff]
      %v320 = vld [vmem:[%s223 + $0x1a8] sm:$0xff]
      %v321 = vld [vmem:[%s223 + $0x1b0] sm:$0xff]
      %v322 = vld [vmem:[%s223 + $0x1b8] sm:$0xff]
      %v323 = vld [vmem:[%s223 + $0x1c0] sm:$0xff]
      %v324 = vld [vmem:[%s223 + $0x1c8] sm:$0xff]
      %v325 = vld [vmem:[%s223 + $0x1d0] sm:$0xff]
      %v326 = vld [vmem:[%s223 + $0x1d8] sm:$0xff]
      %v327 = vld [vmem:[%s223 + $0x1e0] sm:$0xff]
      %v328 = vld [vmem:[%s223 + $0x1e8] sm:$0xff]
      %v329 = vld [vmem:[%s223 + $0x1f0] sm:$0xff]
      %v330 = vld [vmem:[%s223 + $0x1f8] sm:$0xff]
      %s331 = smul.u32 %s18, 2
      %s332 = scalar_lea.vmem %s2, %s331
      %v333 = vld [vmem:[%s332] sm:$0x3]
      %v335 = vlaneseq
      %v336 = vshrl.u32 %v335, 7
      %v337 = vsub.s32 0, %v336
      %v338 = vrot.slane %v333, %v337
      %v339 = vlaneseq
      %v340 = vshrl.u32 %v339, 7
      %v341 = vsub.s32 1, %v340
      %v342 = vrot.slane %v333, %v341
      %345 = vmatprep.subr.mxu0 %v268
      %346 = vmatpush1.msra.mxu0 %v267
      %347 = vmatprep.subr.mxu0 %v270
      %348 = vmatpush1.msra.mxu0 %v269
      %349 = vmatprep.subr.mxu0 %v272
      %350 = vmatpush1.msra.mxu0 %v271
      %351 = vmatprep.subr.mxu0 %v274
      %352 = vmatpush1.msra.mxu0 %v273
      %353 = vmatprep.subr.mxu0 %v276
      %354 = vmatpush1.msra.mxu0 %v275
      %355 = vmatprep.subr.mxu0 %v278
      %356 = vmatpush1.msra.mxu0 %v277
      %357 = vmatprep.subr.mxu0 %v280
      %358 = vmatpush1.msra.mxu0 %v279
      %359 = vmatprep.subr.mxu0 %v282
      %360 = vmatpush1.msra.mxu0 %v281
      %361 = vmatprep.subr.mxu0 %v284
      %362 = vmatpush1.msra.mxu0 %v283
      %363 = vmatprep.subr.mxu0 %v286
      %364 = vmatpush1.msra.mxu0 %v285
      %365 = vmatprep.subr.mxu0 %v288
      %366 = vmatpush1.msra.mxu0 %v287
      %367 = vmatprep.subr.mxu0 %v290
      %368 = vmatpush1.msra.mxu0 %v289
      %369 = vmatprep.subr.mxu0 %v292
      %370 = vmatpush1.msra.mxu0 %v291
      %371 = vmatprep.subr.mxu0 %v294
      %372 = vmatpush1.msra.mxu0 %v293
      %373 = vmatprep.subr.mxu0 %v296
      %374 = vmatpush1.msra.mxu0 %v295
      %375 = vmatprep.subr.mxu0 %v298
      %376 = vmatpush1.msra.mxu0 %v297
      %377 = vmatprep.subr.mxu0 %v300
      %378 = vmatpush1.msra.mxu0 %v299
      %379 = vmatprep.subr.mxu0 %v302
      %380 = vmatpush1.msra.mxu0 %v301
      %381 = vmatprep.subr.mxu0 %v304
      %382 = vmatpush1.msra.mxu0 %v303
      %383 = vmatprep.subr.mxu0 %v306
      %384 = vmatpush1.msra.mxu0 %v305
      %385 = vmatprep.subr.mxu0 %v308
      %386 = vmatpush1.msra.mxu0 %v307
      %387 = vmatprep.subr.mxu0 %v310
      %388 = vmatpush1.msra.mxu0 %v309
      %389 = vmatprep.subr.mxu0 %v312
      %390 = vmatpush1.msra.mxu0 %v311
      %391 = vmatprep.subr.mxu0 %v314
      %392 = vmatpush1.msra.mxu0 %v313
      %393 = vmatprep.subr.mxu0 %v316
      %394 = vmatpush1.msra.mxu0 %v315
      %395 = vmatprep.subr.mxu0 %v318
      %396 = vmatpush1.msra.mxu0 %v317
      %397 = vmatprep.subr.mxu0 %v320
      %398 = vmatpush1.msra.mxu0 %v319
      %399 = vmatprep.subr.mxu0 %v322
      %400 = vmatpush1.msra.mxu0 %v321
      %401 = vmatprep.subr.mxu0 %v324
      %402 = vmatpush1.msra.mxu0 %v323
      %403 = vmatprep.subr.mxu0 %v326
      %404 = vmatpush1.msra.mxu0 %v325
      %405 = vmatprep.subr.mxu0 %v328
      %406 = vmatpush1.msra.mxu0 %v327
      %407 = vmatprep.subr.mxu0 %v330
      %408 = vmatpush1.msra.mxu0 %v329
      %409 = vmatprep.mubr.f32.mxu0 %v236
      %410 = vmatmul.mubr.f32.gmra.mrb[0].mxu0 %v235
      %v411 = vpop.f32.mrb[0].mxu0
      %v412 = vadd.f32 %v338, %v411
      %v413 = vpop.f32.mrb[0].mxu0
      %v414 = vadd.f32 %v342, %v413
      %415 = vmatprep.mubr.f32.mxu0 %v238
      %416 = vmatmul.mubr.f32.gmra.mrb[0].mxu0 %v237
      %v417 = vpop.f32.mrb[0].mxu0
      %v418 = vadd.f32 %v338, %v417
      %v419 = vpop.f32.mrb[0].mxu0
      %v420 = vadd.f32 %v342, %v419
      %421 = vmatprep.mubr.f32.mxu0 %v240
      %422 = vmatmul.mubr.f32.gmra.mrb[0].mxu0 %v239
      %v423 = vpop.f32.mrb[0].mxu0
      %v424 = vadd.f32 %v338, %v423
      %v425 = vpop.f32.mrb[0].mxu0
      %v426 = vadd.f32 %v342, %v425
      %427 = vmatprep.mubr.f32.mxu0 %v242
      %428 = vmatmul.mubr.f32.gmra.mrb[0].mxu0 %v241
      %v429 = vpop.f32.mrb[0].mxu0
      %v430 = vadd.f32 %v338, %v429
      %v431 = vpop.f32.mrb[0].mxu0
      %v432 = vadd.f32 %v342, %v431
      %433 = vmatprep.mubr.f32.mxu0 %v244
      %434 = vmatmul.mubr.f32.gmra.mrb[0].mxu0 %v243
      %v435 = vpop.f32.mrb[0].mxu0
      %v436 = vadd.f32 %v338, %v435
      %v437 = vpop.f32.mrb[0].mxu0
      %v438 = vadd.f32 %v342, %v437
      %439 = vmatprep.mubr.f32.mxu0 %v246
      %440 = vmatmul.mubr.f32.gmra.mrb[0].mxu0 %v245
      %v441 = vpop.f32.mrb[0].mxu0
      %v442 = vadd.f32 %v338, %v441
      %v443 = vpop.f32.mrb[0].mxu0
      %v444 = vadd.f32 %v342, %v443
      %445 = vmatprep.mubr.f32.mxu0 %v248
      %446 = vmatmul.mubr.f32.gmra.mrb[0].mxu0 %v247
      %v447 = vpop.f32.mrb[0].mxu0
      %v448 = vadd.f32 %v338, %v447
      %v449 = vpop.f32.mrb[0].mxu0
      %v450 = vadd.f32 %v342, %v449
      %451 = vmatprep.mubr.f32.mxu0 %v250
      %452 = vmatmul.mubr.f32.gmra.mrb[0].mxu0 %v249
      %v453 = vpop.f32.mrb[0].mxu0
      %v454 = vadd.f32 %v338, %v453
      %v455 = vpop.f32.mrb[0].mxu0
      %v456 = vadd.f32 %v342, %v455
      %457 = vmatprep.mubr.f32.mxu0 %v252
      %458 = vmatmul.mubr.f32.gmra.mrb[0].mxu0 %v251
      %v459 = vpop.f32.mrb[0].mxu0
      %v460 = vadd.f32 %v338, %v459
      %v461 = vpop.f32.mrb[0].mxu0
      %v462 = vadd.f32 %v342, %v461
      %463 = vmatprep.mubr.f32.mxu0 %v254
      %464 = vmatmul.mubr.f32.gmra.mrb[0].mxu0 %v253
      %v465 = vpop.f32.mrb[0].mxu0
      %v466 = vadd.f32 %v338, %v465
      %v467 = vpop.f32.mrb[0].mxu0
      %v468 = vadd.f32 %v342, %v467
      %469 = vmatprep.mubr.f32.mxu0 %v256
      %470 = vmatmul.mubr.f32.gmra.mrb[0].mxu0 %v255
      %v471 = vpop.f32.mrb[0].mxu0
      %v472 = vadd.f32 %v338, %v471
      %v473 = vpop.f32.mrb[0].mxu0
      %v474 = vadd.f32 %v342, %v473
      %475 = vmatprep.mubr.f32.mxu0 %v258
      %476 = vmatmul.mubr.f32.gmra.mrb[0].mxu0 %v257
      %v477 = vpop.f32.mrb[0].mxu0
      %v478 = vadd.f32 %v338, %v477
      %v479 = vpop.f32.mrb[0].mxu0
      %v480 = vadd.f32 %v342, %v479
      %481 = vmatprep.mubr.f32.mxu0 %v260
      %482 = vmatmul.mubr.f32.gmra.mrb[0].mxu0 %v259
      %v483 = vpop.f32.mrb[0].mxu0
      %v484 = vadd.f32 %v338, %v483
      %v485 = vpop.f32.mrb[0].mxu0
      %v486 = vadd.f32 %v342, %v485
      %487 = vmatprep.mubr.f32.mxu0 %v262
      %488 = vmatmul.mubr.f32.gmra.mrb[0].mxu0 %v261
      %v489 = vpop.f32.mrb[0].mxu0
      %v490 = vadd.f32 %v338, %v489
      %v491 = vpop.f32.mrb[0].mxu0
      %v492 = vadd.f32 %v342, %v491
      %493 = vmatprep.mubr.f32.mxu0 %v264
      %494 = vmatmul.mubr.f32.gmra.mrb[0].mxu0 %v263
      %v495 = vpop.f32.mrb[0].mxu0
      %v496 = vadd.f32 %v338, %v495
      %v497 = vpop.f32.mrb[0].mxu0
      %v498 = vadd.f32 %v342, %v497
      %499 = vmatprep.mubr.f32.mxu0 %v266
      %500 = vmatmul.mubr.f32.gmra.mrb[0].mxu0 %v265
      %v501 = vpop.f32.mrb[0].mxu0
      %v502 = vadd.f32 %v338, %v501
      %v503 = vpop.f32.mrb[0].mxu0
      %v504 = vadd.f32 %v342, %v503
      %505 = vdwg.mxu0
      %506 = vst [vmem:[%s233] sm:$0xff] %v412
      %507 = vst [vmem:[%s233 + $0x8] sm:$0xff] %v414
      %508 = vst [vmem:[%s233 + $0x10] sm:$0xff] %v418
      %509 = vst [vmem:[%s233 + $0x18] sm:$0xff] %v420
      %510 = vst [vmem:[%s233 + $0x20] sm:$0xff] %v424
      %511 = vst [vmem:[%s233 + $0x28] sm:$0xff] %v426
      %512 = vst [vmem:[%s233 + $0x30] sm:$0xff] %v430
      %513 = vst [vmem:[%s233 + $0x38] sm:$0xff] %v432
      %514 = vst [vmem:[%s233 + $0x40] sm:$0xff] %v436
      %515 = vst [vmem:[%s233 + $0x48] sm:$0xff] %v438
      %516 = vst [vmem:[%s233 + $0x50] sm:$0xff] %v442
      %517 = vst [vmem:[%s233 + $0x58] sm:$0xff] %v444
      %518 = vst [vmem:[%s233 + $0x60] sm:$0xff] %v448
      %519 = vst [vmem:[%s233 + $0x68] sm:$0xff] %v450
      %520 = vst [vmem:[%s233 + $0x70] sm:$0xff] %v454
      %521 = vst [vmem:[%s233 + $0x78] sm:$0xff] %v456
      %522 = vst [vmem:[%s233 + $0x80] sm:$0xff] %v460
      %523 = vst [vmem:[%s233 + $0x88] sm:$0xff] %v462
      %524 = vst [vmem:[%s233 + $0x90] sm:$0xff] %v466
      %525 = vst [vmem:[%s233 + $0x98] sm:$0xff] %v468
      %526 = vst [vmem:[%s233 + $0xa0] sm:$0xff] %v472
      %527 = vst [vmem:[%s233 + $0xa8] sm:$0xff] %v474
      %528 = vst [vmem:[%s233 + $0xb0] sm:$0xff] %v478
      %529 = vst [vmem:[%s233 + $0xb8] sm:$0xff] %v480
      %530 = vst [vmem:[%s233 + $0xc0] sm:$0xff] %v484
      %531 = vst [vmem:[%s233 + $0xc8] sm:$0xff] %v486
      %532 = vst [vmem:[%s233 + $0xd0] sm:$0xff] %v490
      %533 = vst [vmem:[%s233 + $0xd8] sm:$0xff] %v492
      %534 = vst [vmem:[%s233 + $0xe0] sm:$0xff] %v496
      %535 = vst [vmem:[%s233 + $0xe8] sm:$0xff] %v498
      %536 = vst [vmem:[%s233 + $0xf0] sm:$0xff] %v502
      %537 = vst [vmem:[%s233 + $0xf8] sm:$0xff] %v504
      %s538 = smul.u32 16, %s19
      %p539 = scmp.lt.s32.totalorder %s18, 1
      %s540 = scalar_select %p539, %s18, 1
      %p541 = scmp.lt.s32.totalorder %s538, 15
      %s542 = scalar_select %p541, %s538, 15
      %s543 = smul.addr %s542, 2
      %s544 = smul.addr %s540, 32
      %s545 = sadd.s32 %s543, %s544
      %s546 = smul.addr %s545, 8
      %s547 = scalar_lea.vmem %s3, %s546
      // Predicated region
      $region33: #{block_linear.1} parent=31 // pred_check
        %p548 = pneg %p121
      $region34: #{block_linear.1} parent=31 // pred_check_branch
        %550 = sbr.rel (%p548) target = $region36
      $region35: #{block_linear.1} parent=31 // pred_region
        %s551 = smul.u32 16, %s19
      $region36: #{block_linear.1} parent=31 // pred_fallthru
        _
    $region32: #{block_linear.1} parent=5 // pred_fallthru
      _
    %p552 = scmp.le.s32.totalorder 2, %s9
    // Predicated region
    $region37: #{block_linear.1} parent=5 // pred_check
      %p553 = pneg %p552
    $region38: #{block_linear.1} parent=5 // pred_check_branch
      %555 = sbr.rel (%p553) target = $region40
    $region39: #{block_linear.1} parent=5 // pred_region
      %s556 = ssub.s32 %s9, 2
      // Predicated region
      $region41: #{block_linear.1} parent=39 // pred_check
        %p557 = pneg %p127
      $region42: #{block_linear.1} parent=39 // pred_check_branch
        %559 = sbr.rel (%p557) target = $region44
      $region43: #{block_linear.1} parent=39 // pred_region
        %s560 = smul.u32 16, %s21
        %p561 = scmp.lt.s32.totalorder %s20, 1
        %s562 = scalar_select %p561, %s20, 1
        %p563 = scmp.lt.s32.totalorder %s560, 15
        %s564 = scalar_select %p563, %s560, 15
        %s565 = smul.addr %s564, 2
        %s566 = smul.addr %s562, 32
        %s567 = sadd.s32 %s565, %s566
        %s568 = smul.addr %s567, 8
        %s569 = scalar_lea.vmem %s3, %s568
      $region44: #{block_linear.1} parent=39 // pred_fallthru
        _
    $region40: #{block_linear.1} parent=5 // pred_fallthru
      _
  $region6: #{block_linear.1} parent=0 // loop_footer
    %s13 = sadd.s32 1, %s9
  $region7: #{block_linear.1} parent=0 // loop_footer_branch
    %8 = sbr.rel target = $region3
  $region8: #{block_linear.1} parent=0 // loop_exit
    _

</llo_original>
